<compile_context>
chip_gen: v5e
topology: v5e:2x2
jax: 0.10.0
libtpu: 0.0.40
codegen_flags: <defaults>
</compile_context>

<pallas_src>
import jax
import jax.numpy as jnp
from jax.experimental import pallas as pl
from jax.experimental.pallas import tpu as pltpu


def _round_up(x, m):
    return (x + m - 1) // m * m


def _pick_batch_tile(B, max_tile=1024):
    """Batch tile sized from B: no huge padding for small B, >=2 steps when large."""
    if B <= 128:
        return max(8, _round_up(B, 8))            # single (or exact) small step
    # aim for at least 2 grid steps (v7x has two TensorCores), 16-aligned tiles
    return min(max_tile, _round_up(pl.cdiv(B, 2), 16))


def _vcl_kernel(x_ref, w1_ref, w2_ref, w3_ref, mask_ref, o_ref):
    # x_ref   : (TB, INP)    original dtype (batch tile, unpadded feature dim)
    # wN_ref  : pre-transposed (in, out) bf16, zero-padded to 128 lanes, resident
    # mask_ref: (1, OUT_P) f32 additive mask (0 for real classes, -1e30 for padding)
    x = x_ref[...].astype(jnp.bfloat16)

    # layer 1: x @ w1t  (f32 MXU accumulate), ReLU, re-feed MXU in bf16
    h1 = jnp.maximum(
        jnp.dot(x, w1_ref[...], preferred_element_type=jnp.float32), 0.0)

    # layer 2
    h2 = jnp.maximum(
        jnp.dot(h1.astype(jnp.bfloat16), w2_ref[...],
                preferred_element_type=jnp.float32), 0.0)

    # layer 3 logits (+ additive mask so softmax ignores padded class columns)
    logits = jnp.dot(h2.astype(jnp.bfloat16), w3_ref[...],
                     preferred_element_type=jnp.float32)
    logits = logits + mask_ref[...]

    # numerically-stable softmax over the lane-dense class axis; exact divide
    # (the extra cost is fully hidden under DMA in this memory-bound kernel).
    m = jnp.max(logits, axis=-1, keepdims=True)
    e = jnp.exp(logits - m)
    denom = jnp.sum(e, axis=-1, keepdims=True)
    o_ref[...] = (e / denom).astype(o_ref.dtype)


def vcl_forward(x, w1, w2, w3, *, max_batch_tile=1024):
    """Fused VCL forward (mean weights).

    x : (B, INP); w1/w2/w3 in torch F.linear layout (out_features, in_features).
    Returns softmax probabilities of shape (B, OUT), float32.
    """
    B, INP = x.shape
    HID = w1.shape[0]
    OUT = w3.shape[0]
    assert w1.shape == (HID, INP)
    assert w2.shape == (HID, HID)
    assert w3.shape == (OUT, HID)

    LANE = 128
    HID_P = _round_up(HID, LANE)
    OUT_P = _round_up(OUT, LANE)

    bf = jnp.bfloat16
    # One-time wrapper-side prep: weights are tiny, pad + transpose + cast to bf16.
    w1t = jnp.zeros((INP, HID_P), bf).at[:, :HID].set(w1.T.astype(bf))
    w2t = jnp.zeros((HID_P, HID_P), bf).at[:HID, :HID].set(w2.T.astype(bf))
    w3t = jnp.zeros((HID_P, OUT_P), bf).at[:HID, :OUT].set(w3.T.astype(bf))
    # Additive softmax mask for padded class columns (tiny, grid-invariant).
    mask = jnp.full((1, OUT_P), -1e30, jnp.float32).at[:, :OUT].set(0.0)

    tile = _pick_batch_tile(B, max_batch_tile)
    grid = (pl.cdiv(B, tile),)          # partial last block handled by Pallas

    itemsize = jnp.dtype(x.dtype).itemsize
    cost = pl.CostEstimate(
        flops=2 * B * (INP * HID_P + HID_P * HID_P + HID_P * OUT_P),
        transcendentals=B * OUT_P,
        bytes_accessed=(B * INP * itemsize
                        + (w1t.size + w2t.size + w3t.size) * 2
                        + OUT_P * 4
                        + B * OUT_P * 2),
    )

    out = pl.pallas_call(
        _vcl_kernel,
        out_shape=jax.ShapeDtypeStruct((B, OUT_P), jnp.bfloat16),
        grid_spec=pltpu.PrefetchScalarGridSpec(
            num_scalar_prefetch=0,
            grid=grid,
            in_specs=[
                pl.BlockSpec((tile, INP), lambda i: (i, 0)),     # x: batch-tiled, unpadded
                pl.BlockSpec((INP, HID_P), lambda i: (0, 0)),    # w1t: resident
                pl.BlockSpec((HID_P, HID_P), lambda i: (0, 0)),  # w2t: resident
                pl.BlockSpec((HID_P, OUT_P), lambda i: (0, 0)),  # w3t: resident
                pl.BlockSpec((1, OUT_P), lambda i: (0, 0)),      # mask: resident
            ],
            out_specs=pl.BlockSpec((tile, OUT_P), lambda i: (i, 0)),
        ),
        compiler_params=pltpu.CompilerParams(
            dimension_semantics=("parallel",),
        ),
        cost_estimate=cost,
    )(x, w1t, w2t, w3t, mask)

    # Slice off padded class columns; return f32 to match the PyTorch module.
    return out[:B, :OUT].astype(jnp.float32)


def vcl_reference(x, w1, w2, w3):
    """Pure-JAX reference mirroring the kernel's bf16-feed / f32-accumulate math."""
    f32, bf = jnp.float32, jnp.bfloat16
    xb = x.astype(bf).astype(f32)
    w1b = w1.astype(bf).astype(f32)
    w2b = w2.astype(bf).astype(f32)
    w3b = w3.astype(bf).astype(f32)
    h1 = jnp.maximum(xb @ w1b.T, 0.0).astype(bf).astype(f32)
    h2 = jnp.maximum(h1 @ w2b.T, 0.0).astype(bf).astype(f32)
    logits = h2 @ w3b.T
    return jax.nn.softmax(logits, axis=-1)


if __name__ == "__main__":
    # Small shapes consistent with the module: VCL(input_size=32, hidden_size=32, output_size=16)
    B, INP, HID, OUT = 8, 32, 32, 16

    key = jax.random.PRNGKey(0)
    kx, k1, k2, k3 = jax.random.split(key, 4)

    x = jax.random.normal(kx, (B, INP), dtype=jnp.float32)

    # Deterministic synthetic parameters (the module's init w_mu = 1e-6 everywhere is
    # degenerate; use small deterministic random values so the softmax is nontrivial).
    # Torch layout: (out_features, in_features).
    w1 = 0.1 * jax.random.normal(k1, (HID, INP), dtype=jnp.float32)
    w2 = 0.1 * jax.random.normal(k2, (HID, HID), dtype=jnp.float32)
    w3 = 0.1 * jax.random.normal(k3, (OUT, HID), dtype=jnp.float32)

    out = vcl_forward(x, w1, w2, w3)
    out = jax.block_until_ready(out)

    ref = vcl_reference(x, w1, w2, w3)
    assert out.shape == (B, OUT)
    # bf16 MXU feed + bf16 output store -> tolerance reflects bf16 rounding (~0.4% rel)
    assert jnp.allclose(out, ref, atol=1.5e-2, rtol=2e-2), "mismatch vs JAX reference"
    # rows of a softmax output sum to 1 (bf16-rounded per-class probabilities)
    assert jnp.allclose(jnp.sum(out, axis=-1), 1.0, atol=1.5e-2)

    # TODO(synk): the stochastic sampling=True path (w ~ Normal(w_mu, 1)) and the
    # KL / loss_layer terms are training-time host-side math, not part of this
    # fused forward kernel.
    print("KERNEL_OK")
</pallas_src>

<mosaic_0001>
module attributes {stable_mosaic.version = 11 : i64} {
  func.func @_vcl_kernel(%arg0: i32, %arg1: memref<8x32xf32, #tpu.memory_space<vmem>>, %arg2: memref<32x128xbf16, #tpu.memory_space<vmem>>, %arg3: memref<128x128xbf16, #tpu.memory_space<vmem>>, %arg4: memref<128x128xbf16, #tpu.memory_space<vmem>>, %arg5: memref<1x128xf32, #tpu.memory_space<vmem>>, %arg6: memref<8x128xbf16, #tpu.memory_space<vmem>>) attributes {dimension_semantics = [#tpu.dimension_semantics<parallel>], iteration_bounds = array<i64: 1>, scalar_prefetch = 0 : i64, scratch_operands = 0 : i64, tpu.core_type = #tpu.core_type<tc>, window_params = [{transform_indices = @transform_0, window_bounds = array<i64: 8, 32>}, {pipeline_mode = #tpu.pipeline_mode<synchronous>, transform_indices = @transform_1, window_bounds = array<i64: 32, 128>}, {pipeline_mode = #tpu.pipeline_mode<synchronous>, transform_indices = @transform_2, window_bounds = array<i64: 128, 128>}, {pipeline_mode = #tpu.pipeline_mode<synchronous>, transform_indices = @transform_3, window_bounds = array<i64: 128, 128>}, {pipeline_mode = #tpu.pipeline_mode<synchronous>, transform_indices = @transform_4, window_bounds = array<i64: 1, 128>}, {transform_indices = @transform_5, window_bounds = array<i64: 8, 128>}]} {
    %c0 = arith.constant 0 : index
    %c0_0 = arith.constant 0 : index
    %0 = vector.load %arg1[%c0, %c0_0] : memref<8x32xf32, #tpu.memory_space<vmem>>, vector<8x32xf32>
    %1 = arith.truncf %0 : vector<8x32xf32> to vector<8x32xbf16>
    %c0_1 = arith.constant 0 : index
    %c0_2 = arith.constant 0 : index
    %2 = vector.load %arg2[%c0_1, %c0_2] : memref<32x128xbf16, #tpu.memory_space<vmem>>, vector<32x128xbf16>
    %cst = arith.constant dense<0.000000e+00> : vector<8x128xf32>
    %3 = tpu.matmul %1, %2, %cst {dimension_numbers = #tpu.dot_dimension_numbers<[1], [0], [0], [1], [0, 0, 1, 1], [], []>} : vector<8x32xbf16>, vector<32x128xbf16>, vector<8x128xf32> -> vector<8x128xf32>
    %cst_3 = arith.constant 0.000000e+00 : f32
    %4 = vector.broadcast %cst_3 : f32 to vector<8x128xf32>
    %5 = arith.maximumf %3, %4 : vector<8x128xf32>
    %6 = arith.truncf %5 : vector<8x128xf32> to vector<8x128xbf16>
    %c0_4 = arith.constant 0 : index
    %c0_5 = arith.constant 0 : index
    %7 = vector.load %arg3[%c0_4, %c0_5] : memref<128x128xbf16, #tpu.memory_space<vmem>>, vector<128x128xbf16>
    %cst_6 = arith.constant dense<0.000000e+00> : vector<8x128xf32>
    %8 = tpu.matmul %6, %7, %cst_6 {dimension_numbers = #tpu.dot_dimension_numbers<[1], [0], [0], [1], [0, 0, 1, 1], [], []>} : vector<8x128xbf16>, vector<128x128xbf16>, vector<8x128xf32> -> vector<8x128xf32>
    %cst_7 = arith.constant 0.000000e+00 : f32
    %9 = vector.broadcast %cst_7 : f32 to vector<8x128xf32>
    %10 = arith.maximumf %8, %9 : vector<8x128xf32>
    %11 = arith.truncf %10 : vector<8x128xf32> to vector<8x128xbf16>
    %c0_8 = arith.constant 0 : index
    %c0_9 = arith.constant 0 : index
    %12 = vector.load %arg4[%c0_8, %c0_9] : memref<128x128xbf16, #tpu.memory_space<vmem>>, vector<128x128xbf16>
    %cst_10 = arith.constant dense<0.000000e+00> : vector<8x128xf32>
    %13 = tpu.matmul %11, %12, %cst_10 {dimension_numbers = #tpu.dot_dimension_numbers<[1], [0], [0], [1], [0, 0, 1, 1], [], []>} : vector<8x128xbf16>, vector<128x128xbf16>, vector<8x128xf32> -> vector<8x128xf32>
    %c0_11 = arith.constant 0 : index
    %c0_12 = arith.constant 0 : index
    %14 = vector.load %arg5[%c0_11, %c0_12] : memref<1x128xf32, #tpu.memory_space<vmem>>, vector<1x128xf32>
    %15 = vector.broadcast %14 : vector<1x128xf32> to vector<8x128xf32>
    %16 = arith.addf %13, %15 : vector<8x128xf32>
    %cst_13 = arith.constant dense<0xFF800000> : vector<8xf32>
    %17 = vector.multi_reduction <maximumf>, %16, %cst_13 [1] : vector<8x128xf32> to vector<8xf32>
    %18 = vector.shape_cast %17 : vector<8xf32> to vector<8x1xf32>
    %19 = vector.broadcast %18 : vector<8x1xf32> to vector<8x128xf32>
    %20 = arith.subf %16, %19 : vector<8x128xf32>
    %21 = math.exp %20 : vector<8x128xf32>
    %cst_14 = arith.constant dense<0.000000e+00> : vector<8xf32>
    %22 = vector.multi_reduction <add>, %21, %cst_14 [1] : vector<8x128xf32> to vector<8xf32>
    %23 = vector.shape_cast %22 : vector<8xf32> to vector<8x1xf32>
    %24 = vector.broadcast %23 : vector<8x1xf32> to vector<8x128xf32>
    %25 = arith.divf %21, %24 : vector<8x128xf32>
    %26 = arith.truncf %25 : vector<8x128xf32> to vector<8x128xbf16>
    %c0_15 = arith.constant 0 : index
    %c0_16 = arith.constant 0 : index
    %27 = vector.load %arg6[%c0_15, %c0_16] : memref<8x128xbf16, #tpu.memory_space<vmem>>, vector<8x128xbf16>
    tpu.vector_store %arg6[%c0_15, %c0_16], %26 {strides = array<i32>} : memref<8x128xbf16, #tpu.memory_space<vmem>>, vector<8x128xbf16>,
    return
  }
  func.func @transform_0(%arg0: i32) -> (i32, i32) {
    %c0_i32 = arith.constant 0 : i32
    %c0_i32_0 = arith.constant 0 : i32
    return %arg0, %c0_i32 : i32, i32
  }
  func.func @transform_1(%arg0: i32) -> (i32, i32) {
    %c0_i32 = arith.constant 0 : i32
    %c0_i32_0 = arith.constant 0 : i32
    %c0_i32_1 = arith.constant 0 : i32
    return %c0_i32, %c0_i32_0 : i32, i32
  }
  func.func @transform_2(%arg0: i32) -> (i32, i32) {
    %c0_i32 = arith.constant 0 : i32
    %c0_i32_0 = arith.constant 0 : i32
    %c0_i32_1 = arith.constant 0 : i32
    return %c0_i32, %c0_i32_0 : i32, i32
  }
  func.func @transform_3(%arg0: i32) -> (i32, i32) {
    %c0_i32 = arith.constant 0 : i32
    %c0_i32_0 = arith.constant 0 : i32
    %c0_i32_1 = arith.constant 0 : i32
    return %c0_i32, %c0_i32_0 : i32, i32
  }
  func.func @transform_4(%arg0: i32) -> (i32, i32) {
    %c0_i32 = arith.constant 0 : i32
    %c0_i32_0 = arith.constant 0 : i32
    %c0_i32_1 = arith.constant 0 : i32
    return %c0_i32, %c0_i32_0 : i32, i32
  }
  func.func @transform_5(%arg0: i32) -> (i32, i32) {
    %c0_i32 = arith.constant 0 : i32
    %c0_i32_0 = arith.constant 0 : i32
    return %arg0, %c0_i32 : i32, i32
  }
}

</mosaic_0001>

<llo_original>
// kernel: tpu_custom_call.1
$region0: #{tpu_custom_call.1}
  #allocation0 [shape = 'u32[]', space=smem, size = 0x4, offset = 0x4, fixed_abs, tag = 'smem constant byte address 0x4 - core index']
  #allocation1 [shape = 'u32[72,128]{1,0:T(1,128)}', space=vmem, size = 0x9000, scoped, tag = 'internal scratch']
  %s0 = inlined_call_operand.hbm [shape: f32[8,32], index: 0, kind: input, shape index: {}]
  %s1 = inlined_call_operand.hbm [shape: bf16[32,128], index: 1, kind: input, shape index: {}]
  %s2 = inlined_call_operand.hbm [shape: bf16[128,128], index: 2, kind: input, shape index: {}]
  %s3 = inlined_call_operand.hbm [shape: bf16[128,128], index: 3, kind: input, shape index: {}]
  %s4 = inlined_call_operand.vmem [shape: f32[1,128], index: 4, kind: input, shape index: {}]
  %s5 = inlined_call_operand.hbm [shape: bf16[8,128], index: 5, kind: output, shape index: {}]
  %s6 = sld [smem:[#allocation0]]
  $region46: #{tpu_custom_call.1} parent=0
    _
  %s8 = ssub.s32 1, %s6
  %s9 = scalar_select 0, %s8, %s6
  $region1: #{tpu_custom_call.1} parent=0
    #allocation2 [shape = 'u8[4096]{0}', space=vmem, size = 0x1000, scoped, tag = 'input window, operand 0, single buffered']
    #allocation3 [shape = 's32[1]{0}', space=sflag, size = 0x4, scoped, tag = 'scoped memory for tpu_custom_call.1']
    #allocation4 [shape = 's32[1]{0}', space=sflag, size = 0x4, scoped, tag = 'scoped memory for tpu_custom_call.1']
    #allocation5 [shape = 'u8[8192]{0}', space=vmem, size = 0x2000, scoped, tag = 'input window, operand 1, single buffered']
    #allocation6 [shape = 's32[1]{0}', space=sflag, size = 0x4, scoped, tag = 'scoped memory for tpu_custom_call.1']
    #allocation7 [shape = 'u8[32768]{0}', space=vmem, size = 0x8000, scoped, tag = 'input window, operand 2, single buffered']
    #allocation8 [shape = 'u8[32768]{0}', space=vmem, size = 0x8000, scoped, tag = 'input window, operand 3, single buffered']
    #allocation9 [shape = 's32[1]{0}', space=sflag, size = 0x4, scoped, tag = 'scoped memory for tpu_custom_call.1']
    #allocation10 [shape = 'u8[2048]{0}', space=vmem, size = 0x800, scoped, tag = 'output window, operand 0, single buffered']
    %10 = vsyncpa [#allocation3], 0
    %11 = vsyncpa [#allocation6], 0
    %12 = vsyncpa [#allocation9], 0
    %13 = vsyncpa [#allocation4], 0
    // Predicated region
    $region2: #{tpu_custom_call.1} parent=1 // pred_check
      _
    $region3: #{tpu_custom_call.1} parent=1 // pred_check_branch
      %15 = sbr.rel (0) target = $region5
    $region4: #{tpu_custom_call.1} parent=1 // pred_region
      %17 = vsyncadd [#allocation3], 0
      %s19 = sshll.u32 %s0, 4
      %s20 = int_to_ptr.hbm [resolvable:$true] %s19
      %s21 = sshll.u32 [#allocation2], 4
      %s22 = int_to_ptr.vmem [resolvable:$true] %s21
      %24 = dma.hbm_to_vmem [thread:$0]  %s20, 128, %s22, [#allocation3]
    $region5: #{tpu_custom_call.1} parent=1 // pred_fallthru
      _
    // Predicated region
    $region6: #{tpu_custom_call.1} parent=1 // pred_check
      _
    $region7: #{tpu_custom_call.1} parent=1 // pred_check_branch
      %26 = sbr.rel (0) target = $region9
    $region8: #{tpu_custom_call.1} parent=1 // pred_region
      %28 = vsyncadd [#allocation6], 0
      %s29 = sshll.u32 %s1, 4
      %s30 = int_to_ptr.hbm [resolvable:$true] %s29
      %s31 = sshll.u32 [#allocation5], 4
      %s32 = int_to_ptr.vmem [resolvable:$true] %s31
      %37 = dma.hbm_to_vmem [thread:$0]  %s30, 256, %s32, [#allocation6], 64, 64, 4
    $region9: #{tpu_custom_call.1} parent=1 // pred_fallthru
      _
    // Predicated region
    $region10: #{tpu_custom_call.1} parent=1 // pred_check
      _
    $region11: #{tpu_custom_call.1} parent=1 // pred_check_branch
      %39 = sbr.rel (0) target = $region13
    $region12: #{tpu_custom_call.1} parent=1 // pred_region
      %41 = vsyncadd [#allocation6], 0
      %s42 = sshll.u32 %s2, 4
      %s43 = int_to_ptr.hbm [resolvable:$true] %s42
      %s44 = sshll.u32 [#allocation7], 4
      %s45 = int_to_ptr.vmem [resolvable:$true] %s44
      %50 = dma.hbm_to_vmem [thread:$0]  %s43, 1024, %s45, [#allocation6], 64, 64, 4
    $region13: #{tpu_custom_call.1} parent=1 // pred_fallthru
      _
    // Predicated region
    $region14: #{tpu_custom_call.1} parent=1 // pred_check
      _
    $region15: #{tpu_custom_call.1} parent=1 // pred_check_branch
      %52 = sbr.rel (0) target = $region17
    $region16: #{tpu_custom_call.1} parent=1 // pred_region
      %54 = vsyncadd [#allocation9], 0
      %s55 = sshll.u32 %s3, 4
      %s56 = int_to_ptr.hbm [resolvable:$true] %s55
      %s57 = sshll.u32 [#allocation8], 4
      %s58 = int_to_ptr.vmem [resolvable:$true] %s57
      %63 = dma.hbm_to_vmem [thread:$0]  %s56, 1024, %s58, [#allocation9], 64, 64, 4
    $region17: #{tpu_custom_call.1} parent=1 // pred_fallthru
      _
    // Predicated region
    $region18: #{tpu_custom_call.1} parent=1 // pred_check
      _
    $region19: #{tpu_custom_call.1} parent=1 // pred_check_branch
      %65 = sbr.rel (0) target = $region21
    $region20: #{tpu_custom_call.1} parent=1 // pred_region
      _
    $region21: #{tpu_custom_call.1} parent=1 // pred_fallthru
      _
    // Predicated region
    $region22: #{tpu_custom_call.1} parent=1 // pred_check
      _
    $region23: #{tpu_custom_call.1} parent=1 // pred_check_branch
      %67 = sbr.rel (0) target = $region25
    $region24: #{tpu_custom_call.1} parent=1 // pred_region
      %69 = dma.done [#allocation3], 128
    $region25: #{tpu_custom_call.1} parent=1 // pred_fallthru
      _
    // Predicated region
    $region26: #{tpu_custom_call.1} parent=1 // pred_check
      _
    $region27: #{tpu_custom_call.1} parent=1 // pred_check_branch
      %71 = sbr.rel (0) target = $region29
    $region28: #{tpu_custom_call.1} parent=1 // pred_region
      %73 = dma.done [#allocation6], 256
    $region29: #{tpu_custom_call.1} parent=1 // pred_fallthru
      _
    // Predicated region
    $region30: #{tpu_custom_call.1} parent=1 // pred_check
      _
    $region31: #{tpu_custom_call.1} parent=1 // pred_check_branch
      %75 = sbr.rel (0) target = $region33
    $region32: #{tpu_custom_call.1} parent=1 // pred_region
      %77 = dma.done [#allocation6], 1024
    $region33: #{tpu_custom_call.1} parent=1 // pred_fallthru
      _
    // Predicated region
    $region34: #{tpu_custom_call.1} parent=1 // pred_check
      _
    $region35: #{tpu_custom_call.1} parent=1 // pred_check_branch
      %79 = sbr.rel (0) target = $region37
    $region36: #{tpu_custom_call.1} parent=1 // pred_region
      %81 = dma.done [#allocation9], 1024
    $region37: #{tpu_custom_call.1} parent=1 // pred_fallthru
      _
    %v83 = vld [vmem:[#allocation2] sm:$0xff]
    %v84 = vpack.c.bf16 %v83, %v83
    %v85 = vld [vmem:[#allocation5] sm:$0xf]
    %v86 = vld [vmem:[#allocation5 + $0x4] sm:$0xf]
    %v87 = vld [vmem:[#allocation5 + $0x8] sm:$0xf]
    %v88 = vld [vmem:[#allocation5 + $0xc] sm:$0xf]
    %v93 = vunpack.c.l.b16 %v85
    %v94 = vunpack.c.l.b16 %v86
    %v95 = vunpack.c.l.b16 %v87
    %v96 = vunpack.c.l.b16 %v88
    %v97 = vpack.c.b16 %v94, %v93
    %v98 = vpack.c.b16 %v96, %v95
    %vm101 = vcmask 261120
    %v103 = vsel %vm101, %v84, 0
    %105 = vmatpush.bf16.msra.mxu0 0
    %106 = vmatpush.bf16.msra.mxu0 0
    %107 = vmatpush.bf16.msra.mxu0 0
    %108 = vmatpush.bf16.msra.mxu0 0
    %109 = vmatpush.bf16.msra.mxu0 0
    %110 = vmatpush.bf16.msra.mxu0 0
    %111 = vmatpush.bf16.msra.mxu0 %v98
    %112 = vmatpush.bf16.msra.mxu0 %v97
    %113 = vmatmul.bf16.gmra.mxu0 %v103
    %v114 = vpop.f32.mrf.mxu0
    %v115 = vadd.f32 0.0, %v114
    %v116 = vpop.f32.mrf.mxu0
    %117 = vdwg.mxu0
    %v118 = vmax.f32 %v115, 0.0
    %v119 = vpack.c.bf16 %v118, %v118
    %v120 = vld [vmem:[#allocation7] sm:$0xf]
    %v121 = vld [vmem:[#allocation7 + $0x4] sm:$0xf]
    %v122 = vld [vmem:[#allocation7 + $0x8] sm:$0xf]
    %v123 = vld [vmem:[#allocation7 + $0xc] sm:$0xf]
    %v124 = vld [vmem:[#allocation7 + $0x10] sm:$0xf]
    %v125 = vld [vmem:[#allocation7 + $0x14] sm:$0xf]
    %v126 = vld [vmem:[#allocation7 + $0x18] sm:$0xf]
    %v127 = vld [vmem:[#allocation7 + $0x1c] sm:$0xf]
    %v128 = vld [vmem:[#allocation7 + $0x20] sm:$0xf]
    %v129 = vld [vmem:[#allocation7 + $0x24] sm:$0xf]
    %v130 = vld [vmem:[#allocation7 + $0x28] sm:$0xf]
    %v131 = vld [vmem:[#allocation7 + $0x2c] sm:$0xf]
    %v132 = vld [vmem:[#allocation7 + $0x30] sm:$0xf]
    %v133 = vld [vmem:[#allocation7 + $0x34] sm:$0xf]
    %v134 = vld [vmem:[#allocation7 + $0x38] sm:$0xf]
    %v135 = vld [vmem:[#allocation7 + $0x3c] sm:$0xf]
    %v152 = vunpack.c.l.b16 %v120
    %v153 = vunpack.c.l.b16 %v121
    %v154 = vunpack.c.l.b16 %v122
    %v155 = vunpack.c.l.b16 %v123
    %v156 = vunpack.c.l.b16 %v124
    %v157 = vunpack.c.l.b16 %v125
    %v158 = vunpack.c.l.b16 %v126
    %v159 = vunpack.c.l.b16 %v127
    %v160 = vunpack.c.l.b16 %v128
    %v161 = vunpack.c.l.b16 %v129
    %v162 = vunpack.c.l.b16 %v130
    %v163 = vunpack.c.l.b16 %v131
    %v164 = vunpack.c.l.b16 %v132
    %v165 = vunpack.c.l.b16 %v133
    %v166 = vunpack.c.l.b16 %v134
    %v167 = vunpack.c.l.b16 %v135
    %v168 = vpack.c.b16 %v153, %v152
    %v169 = vpack.c.b16 %v155, %v154
    %v170 = vpack.c.b16 %v157, %v156
    %v171 = vpack.c.b16 %v159, %v158
    %v172 = vpack.c.b16 %v161, %v160
    %v173 = vpack.c.b16 %v163, %v162
    %v174 = vpack.c.b16 %v165, %v164
    %v175 = vpack.c.b16 %v167, %v166
    %184 = vmatpush.bf16.msra.mxu0 %v175
    %185 = vmatpush.bf16.msra.mxu0 %v174
    %186 = vmatpush.bf16.msra.mxu0 %v173
    %187 = vmatpush.bf16.msra.mxu0 %v172
    %188 = vmatpush.bf16.msra.mxu0 %v171
    %189 = vmatpush.bf16.msra.mxu0 %v170
    %190 = vmatpush.bf16.msra.mxu0 %v169
    %191 = vmatpush.bf16.msra.mxu0 %v168
    %192 = vmatmul.bf16.gmra.mxu0 %v119
    %v193 = vpop.f32.mrf.mxu0
    %v194 = vadd.f32 0.0, %v193
    %v195 = vpop.f32.mrf.mxu0
    %196 = vdwg.mxu0
    %v197 = vmax.f32 %v194, 0.0
    %v198 = vpack.c.bf16 %v197, %v197
    %v199 = vld [vmem:[#allocation8] sm:$0xf]
    %v200 = vld [vmem:[#allocation8 + $0x4] sm:$0xf]
    %v201 = vld [vmem:[#allocation8 + $0x8] sm:$0xf]
    %v202 = vld [vmem:[#allocation8 + $0xc] sm:$0xf]
    %v203 = vld [vmem:[#allocation8 + $0x10] sm:$0xf]
    %v204 = vld [vmem:[#allocation8 + $0x14] sm:$0xf]
    %v205 = vld [vmem:[#allocation8 + $0x18] sm:$0xf]
    %v206 = vld [vmem:[#allocation8 + $0x1c] sm:$0xf]
    %v207 = vld [vmem:[#allocation8 + $0x20] sm:$0xf]
    %v208 = vld [vmem:[#allocation8 + $0x24] sm:$0xf]
    %v209 = vld [vmem:[#allocation8 + $0x28] sm:$0xf]
    %v210 = vld [vmem:[#allocation8 + $0x2c] sm:$0xf]
    %v211 = vld [vmem:[#allocation8 + $0x30] sm:$0xf]
    %v212 = vld [vmem:[#allocation8 + $0x34] sm:$0xf]
    %v213 = vld [vmem:[#allocation8 + $0x38] sm:$0xf]
    %v214 = vld [vmem:[#allocation8 + $0x3c] sm:$0xf]
    %v215 = vld [vmem:[%s4] sm:$0x1]
    %v217 = vperm.slane %v215, 0
    %v235 = vunpack.c.l.b16 %v199
    %v236 = vunpack.c.l.b16 %v200
    %v237 = vunpack.c.l.b16 %v201
    %v238 = vunpack.c.l.b16 %v202
    %v239 = vunpack.c.l.b16 %v203
    %v240 = vunpack.c.l.b16 %v204
    %v241 = vunpack.c.l.b16 %v205
    %v242 = vunpack.c.l.b16 %v206
    %v243 = vunpack.c.l.b16 %v207
    %v244 = vunpack.c.l.b16 %v208
    %v245 = vunpack.c.l.b16 %v209
    %v246 = vunpack.c.l.b16 %v210
    %v247 = vunpack.c.l.b16 %v211
    %v248 = vunpack.c.l.b16 %v212
    %v249 = vunpack.c.l.b16 %v213
    %v250 = vunpack.c.l.b16 %v214
    %v251 = vpack.c.b16 %v236, %v235
    %v252 = vpack.c.b16 %v238, %v237
    %v253 = vpack.c.b16 %v240, %v239
    %v254 = vpack.c.b16 %v242, %v241
    %v255 = vpack.c.b16 %v244, %v243
    %v256 = vpack.c.b16 %v246, %v245
    %v257 = vpack.c.b16 %v248, %v247
    %v258 = vpack.c.b16 %v250, %v249
    %267 = vmatpush.bf16.msra.mxu0 %v258
    %268 = vmatpush.bf16.msra.mxu0 %v257
    %269 = vmatpush.bf16.msra.mxu0 %v256
    %270 = vmatpush.bf16.msra.mxu0 %v255
    %271 = vmatpush.bf16.msra.mxu0 %v254
    %272 = vmatpush.bf16.msra.mxu0 %v253
    %273 = vmatpush.bf16.msra.mxu0 %v252
    %274 = vmatpush.bf16.msra.mxu0 %v251
    %275 = vmatmul.bf16.gmra.mxu0 %v198
    %v276 = vpop.f32.mrf.mxu0
    %v277 = vadd.f32 %v217, %v276
    %v278 = vpop.f32.mrf.mxu0
    %279 = vdwg.mxu0
    %280 = vmax.xlane.f32.xlu0 %v277
    %v281 = vpop.xlane.xlu0 %280
    %v282 = vsub.f32 %v277, %v281
    %v283 = vmul.f32 %v282, 1.442695
    %v284 = vpow.pop %v283
    %285 = vadd.xlane.f32.xlu0 %v284
    %v286 = vpop.xlane.xlu0 %285
    %v287 = vrcp.pop %v286
    %v288 = vmul.f32 %v286, %v287
    %v289 = vsub.f32 1.0, %v288
    %v290 = vmul.f32 %v287, %v289
    %v291 = vadd.f32 %v287, %v290
    %vm292 = vweird.f32 %v286
    %vm293 = vweird.f32 %v287
    %vm294 = vmor %vm292, %vm293
    %v295 = vsel %vm294, %v287, %v291
    %v296 = vand.u32 2147483647, %v286
    %vm297 = vcmp.eq.f32.partialorder %v296, 8.507059e+37
    %v298 = vand.u32 %v286, 2147483648
    %v299 = vor.u32 1.1754944e-38, %v298
    %v300 = vsel %vm297, %v299, %v295
    %v301 = vmul.f32 %v284, %v300
    %v302 = vpack.c.bf16 %v301, %v301
    %303 = vst [vmem:[#allocation10] sm:$0xf] %v302
    // Predicated region
    $region38: #{tpu_custom_call.1} parent=1 // pred_check
      _
    $region39: #{tpu_custom_call.1} parent=1 // pred_check_branch
      %305 = sbr.rel (0) target = $region41
    $region40: #{tpu_custom_call.1} parent=1 // pred_region
      %307 = vsyncadd [#allocation4], 0
      %s309 = sshll.u32 [#allocation10], 4
      %s310 = int_to_ptr.vmem [resolvable:$true] %s309
      %s311 = sshll.u32 %s5, 4
      %s312 = int_to_ptr.hbm [resolvable:$true] %s311
      %314 = dma.vmem_to_hbm [thread:$0]  %s310, 64, %s312, [#allocation4]
    $region41: #{tpu_custom_call.1} parent=1 // pred_fallthru
      _
    // Predicated region
    $region42: #{tpu_custom_call.1} parent=1 // pred_check
      _
    $region43: #{tpu_custom_call.1} parent=1 // pred_check_branch
      %316 = sbr.rel (0) target = $region45
    $region44: #{tpu_custom_call.1} parent=1 // pred_region
      %318 = dma.done [#allocation4], 64
    $region45: #{tpu_custom_call.1} parent=1 // pred_fallthru
      _
    %319 = vsyncpa [#allocation3], 1
    %320 = vsyncpa [#allocation6], 1
    %321 = vsyncpa [#allocation9], 1
    %322 = vsyncpa [#allocation4], 1

</llo_original>
